<compile_context>
chip_gen: v7x
topology: tpu7x:2x2x1
jax: 0.10.0
libtpu: 0.0.40
codegen_flags: <defaults>
</compile_context>

<pallas_src>
import functools

import jax
import jax.numpy as jnp
from jax.experimental import pallas as pl
from jax.experimental.pallas import tpu as pltpu

EPS = 1e-5  # PyTorch BatchNorm1d default eps


def _bn_act(v, gamma, beta, *, relu):
    """Training-mode BatchNorm over rows (+ optional ReLU).

    v: (R, C) f32; gamma/beta: (1, C) f32.  The normalization is folded into a
    single per-channel scale/shift FMA (scale = g * rsqrt(var+eps),
    shift = b - mean*scale); rsqrt runs on the EUP over only (1, C) values.
    """
    mean = jnp.mean(v, axis=0, keepdims=True)                    # (1, C)
    mean_sq = jnp.mean(v * v, axis=0, keepdims=True)             # (1, C)
    var = jnp.maximum(mean_sq - mean * mean, 0.0)                # biased variance
    scale = gamma * jax.lax.rsqrt(var + EPS)                     # (1, C)
    shift = beta - mean * scale                                  # (1, C)
    out = v * scale + shift
    return jnp.maximum(out, 0.0) if relu else out


def bottleneck_kernel(x_ref, w1_ref, w2_ref, w3_ref, wp_ref,
                      g1_ref, b1_ref, g2_ref, b2_ref, g3_ref, b3_ref,
                      gp_ref, bp_ref, o_ref, *, stride, has_projection):
    N, L, Cin = x_ref.shape
    Ch = w1_ref.shape[1]
    Co = w3_ref.shape[1]
    L_out = (L - 1) // stride + 1
    f32, bf16 = jnp.float32, jnp.bfloat16

    x = x_ref[...]                                   # (N, L, Cin) f32
    x2d = x.reshape(N * L, Cin)
    x2d_bf = x2d.astype(bf16)                        # bf16 operands for the MXU

    # ---- conv1 (1x1) + bn1 + relu --------------------------------------------------
    h = jnp.dot(x2d_bf, w1_ref[...], preferred_element_type=f32)     # (N*L, Ch) f32
    h = _bn_act(h, g1_ref[...], b1_ref[...], relu=True)

    # ---- conv2 (kernel=3, padding=1, stride) + bn2 + relu ----------------------------
    # Build the three taps with XLU rolls + boundary masks (rolling the flattened
    # (N*L, Ch) rows wraps across batch boundaries, but exactly those positions are
    # the padding positions and get masked to zero).  The taps are concatenated
    # along the contraction axis so conv2 is a single MXU matmul with K = 3*Ch.
    lpos = jax.lax.broadcasted_iota(jnp.int32, (N * L, Ch), 0) % L
    h_prev = jnp.where(lpos == 0, 0.0, pltpu.roll(h, shift=1, axis=0))          # x[l-1]
    h_next = jnp.where(lpos == L - 1, 0.0, pltpu.roll(h, shift=N * L - 1, axis=0))  # x[l+1]
    taps = jnp.concatenate([h_prev, h, h_next], axis=-1)             # (N*L, 3*Ch)
    if stride != 1:
        # Subsample the taps before the matmul: only L_out positions are computed.
        taps = taps.reshape(N, L, 3 * Ch)[:, ::stride, :].reshape(N * L_out, 3 * Ch)
    out2 = jnp.dot(taps.astype(bf16), w2_ref[...],
                   preferred_element_type=f32)                       # (N*L_out, Ch)
    out2 = _bn_act(out2, g2_ref[...], b2_ref[...], relu=True)

    # ---- conv3 (1x1) + bn3 -----------------------------------------------------------
    out3 = jnp.dot(out2.astype(bf16), w3_ref[...],
                   preferred_element_type=f32)                       # (N*L_out, Co)
    out3 = _bn_act(out3, g3_ref[...], b3_ref[...], relu=False)

    # ---- shortcut --------------------------------------------------------------------
    if has_projection:
        xs_bf = (x2d_bf if stride == 1
                 else x[:, ::stride, :].reshape(N * L_out, Cin).astype(bf16))
        ident = jnp.dot(xs_bf, wp_ref[...], preferred_element_type=f32)
        ident = _bn_act(ident, gp_ref[...], bp_ref[...], relu=False)
    else:
        # Identity shortcut: only valid when Cin == Co and stride == 1 (as in the
        # PyTorch module, which only skips the projection when channels match).
        ident = x2d

    o = jnp.maximum(out3 + ident, 0.0)
    o_ref[...] = o.reshape(N, L_out, Co).astype(o_ref.dtype)


def bottleneck1d_forward_nlc(x_nlc, kp, *, stride=1, has_projection=True):
    """Channels-last entry point.  x_nlc: (N, L, C_in) f32 -> (N, L_out, 4*hidden)."""
    N, L, Cin = x_nlc.shape
    Co = kp["w3"].shape[1]
    L_out = (L - 1) // stride + 1

    kernel = functools.partial(bottleneck_kernel, stride=stride,
                               has_projection=has_projection)
    vmem = pl.BlockSpec(memory_space=pltpu.MemorySpace.VMEM)

    return pl.pallas_call(
        kernel,
        out_shape=jax.ShapeDtypeStruct((N, L_out, Co), jnp.float32),
        in_specs=[vmem] * 13,
        out_specs=vmem,
        compiler_params=pltpu.CompilerParams(vmem_limit_bytes=32 * 1024 * 1024),
    )(x_nlc.astype(jnp.float32), kp["w1"], kp["w2"], kp["w3"], kp["wp"],
      kp["g1"], kp["b1"], kp["g2"], kp["b2"],
      kp["g3"], kp["b3"], kp["gp"], kp["bp"])


def bottleneck1d_forward_ncl(x_ncl, kp, *, stride=1, has_projection=True):
    """PyTorch-layout (N, C, L) convenience wrapper.  Prefer the NLC entry point:
    keeping the surrounding model channels-last avoids two full HBM transpose passes."""
    out = bottleneck1d_forward_nlc(jnp.transpose(x_ncl, (0, 2, 1)), kp,
                                   stride=stride, has_projection=has_projection)
    return jnp.transpose(out, (0, 2, 1))


# ----------------------------- parameter setup / reference -------------------------

def _bf16r(a):
    """Round to the nearest bf16-representable value (kept as f32)."""
    return a.astype(jnp.bfloat16).astype(jnp.float32)


def init_params(key, in_channels, hidden_channels):
    """Deterministic synthetic parameters in PyTorch layouts (conv: (Cout, Cin, K)).

    Conv weights are rounded to bf16-representable f32 values so the bf16-MXU
    kernel and the pure-f32 reference consume identical weights."""
    out_channels = 4 * hidden_channels
    ks = jax.random.split(key, 14)
    def n(k, shape, scale=0.2):
        return scale * jax.random.normal(k, shape, jnp.float32)
    return {
        "conv1_w": _bf16r(n(ks[0], (hidden_channels, in_channels, 1))),
        "conv2_w": _bf16r(n(ks[1], (hidden_channels, hidden_channels, 3))),
        "conv3_w": _bf16r(n(ks[2], (out_channels, hidden_channels, 1))),
        "proj_w":  _bf16r(n(ks[3], (out_channels, in_channels, 1))),
        "bn1_g": 1.0 + n(ks[4], (hidden_channels,), 0.1), "bn1_b": n(ks[5], (hidden_channels,), 0.1),
        "bn2_g": 1.0 + n(ks[6], (hidden_channels,), 0.1), "bn2_b": n(ks[7], (hidden_channels,), 0.1),
        "bn3_g": 1.0 + n(ks[8], (out_channels,), 0.1),    "bn3_b": n(ks[9], (out_channels,), 0.1),
        "bnp_g": 1.0 + n(ks[10], (out_channels,), 0.1),   "bnp_b": n(ks[11], (out_channels,), 0.1),
    }


def to_kernel_params(tp):
    """Convert PyTorch-layout params to the channels-last kernel layout.

    conv weights are stored as bf16 (MXU-native); conv2 is pre-fused into a single
    (3*Ch, Ch) matrix whose row blocks are the k=0,1,2 taps."""
    bf16 = jnp.bfloat16
    w2_fused = jnp.concatenate(
        [jnp.transpose(tp["conv2_w"][:, :, k]) for k in range(3)], axis=0)   # (3*Ch, Ch)
    return {
        "w1": jnp.transpose(tp["conv1_w"][:, :, 0]).astype(bf16),            # (Cin, Ch)
        "w2": w2_fused.astype(bf16),                                         # (3*Ch, Ch)
        "w3": jnp.transpose(tp["conv3_w"][:, :, 0]).astype(bf16),            # (Ch, Co)
        "wp": jnp.transpose(tp["proj_w"][:, :, 0]).astype(bf16),             # (Cin, Co)
        "g1": tp["bn1_g"][None, :], "b1": tp["bn1_b"][None, :],
        "g2": tp["bn2_g"][None, :], "b2": tp["bn2_b"][None, :],
        "g3": tp["bn3_g"][None, :], "b3": tp["bn3_b"][None, :],
        "gp": tp["bnp_g"][None, :], "bp": tp["bnp_b"][None, :],
    }


def ref_forward(x, tp, stride=1, has_projection=True):
    """Pure-JAX f32 reference mirroring the PyTorch forward (NCL, training-mode BN)."""
    def conv1d(v, w, stride=1, pad=0):
        return jax.lax.conv_general_dilated(
            v, w, window_strides=(stride,), padding=[(pad, pad)],
            dimension_numbers=("NCH", "OIH", "NCH"))
    def bn(v, g, b):
        m = jnp.mean(v, axis=(0, 2), keepdims=True)
        var = jnp.mean((v - m) ** 2, axis=(0, 2), keepdims=True)
        return (v - m) * jax.lax.rsqrt(var + EPS) * g[None, :, None] + b[None, :, None]
    relu = lambda v: jnp.maximum(v, 0.0)

    out = relu(bn(conv1d(x, tp["conv1_w"]), tp["bn1_g"], tp["bn1_b"]))
    out = relu(bn(conv1d(out, tp["conv2_w"], stride=stride, pad=1), tp["bn2_g"], tp["bn2_b"]))
    out = bn(conv1d(out, tp["conv3_w"]), tp["bn3_g"], tp["bn3_b"])
    if has_projection:
        identity = bn(conv1d(x, tp["proj_w"], stride=stride), tp["bnp_g"], tp["bnp_b"])
    else:
        identity = x
    return relu(out + identity)


if __name__ == "__main__":
    # Small shapes consistent with the module: batch=2, in_channels=64, L=16,
    # hidden_channels=32 -> out_channels=128, stride=1 (projection shortcut active).
    # hidden=32 makes the output channel (lane) dimension exactly 128 lanes,
    # so the output writeback uses full, unmasked vector stores.
    N, Cin, L, hidden, stride = 2, 64, 16, 32, 1

    key = jax.random.PRNGKey(0)
    pkey, xkey = jax.random.split(key)
    torch_params = init_params(pkey, Cin, hidden)
    kernel_params = to_kernel_params(torch_params)

    # Channels-last activation (kernel-native layout); values rounded to
    # bf16-representable f32 so the only kernel-vs-reference difference is the
    # bf16 rounding of intermediate activations fed to the MXU.
    x_nlc = _bf16r(jax.random.normal(xkey, (N, L, Cin), jnp.float32))

    out = bottleneck1d_forward_nlc(x_nlc, kernel_params, stride=stride,
                                   has_projection=True)
    out = jax.block_until_ready(out)

    # f32 reference operates in PyTorch NCL layout; transpose only for comparison.
    x_ncl = jnp.transpose(x_nlc, (0, 2, 1))
    ref = jnp.transpose(ref_forward(x_ncl, torch_params, stride=stride,
                                    has_projection=True), (0, 2, 1))
    assert out.shape == ref.shape, (out.shape, ref.shape)
    # bf16 MXU operands vs. a pure-f32 reference: allow ~1-2% error.
    assert jnp.allclose(out, ref, atol=2e-2, rtol=2e-2), float(jnp.max(jnp.abs(out - ref)))

    # TODO(synk): stride > 1 path (taps subsampled before the fused matmul) is
    # implemented but not exercised in this demo.
    print("KERNEL_OK")
</pallas_src>

<mosaic_0001>
module attributes {stable_mosaic.version = 11 : i64} {
  func.func @bottleneck_kernel(%arg0: memref<2x16x64xf32, #tpu.memory_space<vmem>>, %arg1: memref<64x32xbf16, #tpu.memory_space<vmem>>, %arg2: memref<96x32xbf16, #tpu.memory_space<vmem>>, %arg3: memref<32x128xbf16, #tpu.memory_space<vmem>>, %arg4: memref<64x128xbf16, #tpu.memory_space<vmem>>, %arg5: memref<1x32xf32, #tpu.memory_space<vmem>>, %arg6: memref<1x32xf32, #tpu.memory_space<vmem>>, %arg7: memref<1x32xf32, #tpu.memory_space<vmem>>, %arg8: memref<1x32xf32, #tpu.memory_space<vmem>>, %arg9: memref<1x128xf32, #tpu.memory_space<vmem>>, %arg10: memref<1x128xf32, #tpu.memory_space<vmem>>, %arg11: memref<1x128xf32, #tpu.memory_space<vmem>>, %arg12: memref<1x128xf32, #tpu.memory_space<vmem>>, %arg13: memref<2x16x128xf32, #tpu.memory_space<vmem>>) attributes {dimension_semantics = [], scalar_prefetch = 0 : i64, scratch_operands = 0 : i64, tpu.core_type = #tpu.core_type<tc>} {
    %c0 = arith.constant 0 : index
    %c0_0 = arith.constant 0 : index
    %c0_1 = arith.constant 0 : index
    %0 = vector.load %arg0[%c0, %c0_0, %c0_1] : memref<2x16x64xf32, #tpu.memory_space<vmem>>, vector<2x16x64xf32>
    %1 = vector.shape_cast %0 : vector<2x16x64xf32> to vector<32x64xf32>
    %2 = arith.truncf %1 : vector<32x64xf32> to vector<32x64xbf16>
    %c0_2 = arith.constant 0 : index
    %c0_3 = arith.constant 0 : index
    %3 = vector.load %arg1[%c0_2, %c0_3] : memref<64x32xbf16, #tpu.memory_space<vmem>>, vector<64x32xbf16>
    %cst = arith.constant dense<0.000000e+00> : vector<32x32xf32>
    %4 = tpu.matmul %2, %3, %cst {dimension_numbers = #tpu.dot_dimension_numbers<[1], [0], [0], [1], [0, 0, 1, 1], [], []>} : vector<32x64xbf16>, vector<64x32xbf16>, vector<32x32xf32> -> vector<32x32xf32>
    %c0_4 = arith.constant 0 : index
    %c0_5 = arith.constant 0 : index
    %5 = vector.load %arg5[%c0_4, %c0_5] : memref<1x32xf32, #tpu.memory_space<vmem>>, vector<1x32xf32>
    %c0_6 = arith.constant 0 : index
    %c0_7 = arith.constant 0 : index
    %6 = vector.load %arg6[%c0_6, %c0_7] : memref<1x32xf32, #tpu.memory_space<vmem>>, vector<1x32xf32>
    %cst_8 = arith.constant dense<0.000000e+00> : vector<32xf32>
    %7 = vector.multi_reduction <add>, %4, %cst_8 [0] : vector<32x32xf32> to vector<32xf32>
    %8 = vector.shape_cast %7 : vector<32xf32> to vector<1x32xf32>
    %cst_9 = arith.constant 3.200000e+01 : f32
    %9 = vector.broadcast %cst_9 : f32 to vector<1x32xf32>
    %10 = arith.divf %8, %9 : vector<1x32xf32>
    %11 = arith.mulf %4, %4 : vector<32x32xf32>
    %cst_10 = arith.constant dense<0.000000e+00> : vector<32xf32>
    %12 = vector.multi_reduction <add>, %11, %cst_10 [0] : vector<32x32xf32> to vector<32xf32>
    %13 = vector.shape_cast %12 : vector<32xf32> to vector<1x32xf32>
    %cst_11 = arith.constant 3.200000e+01 : f32
    %14 = vector.broadcast %cst_11 : f32 to vector<1x32xf32>
    %15 = arith.divf %13, %14 : vector<1x32xf32>
    %16 = arith.mulf %10, %10 : vector<1x32xf32>
    %17 = arith.subf %15, %16 : vector<1x32xf32>
    %cst_12 = arith.constant 0.000000e+00 : f32
    %18 = vector.broadcast %cst_12 : f32 to vector<1x32xf32>
    %19 = arith.maximumf %17, %18 : vector<1x32xf32>
    %cst_13 = arith.constant 9.99999974E-6 : f32
    %20 = vector.broadcast %cst_13 : f32 to vector<1x32xf32>
    %21 = arith.addf %19, %20 : vector<1x32xf32>
    %22 = math.rsqrt %21 : vector<1x32xf32>
    %23 = arith.mulf %5, %22 : vector<1x32xf32>
    %24 = arith.mulf %10, %23 : vector<1x32xf32>
    %25 = arith.subf %6, %24 : vector<1x32xf32>
    %26 = vector.broadcast %23 : vector<1x32xf32> to vector<32x32xf32>
    %27 = arith.mulf %4, %26 : vector<32x32xf32>
    %28 = vector.broadcast %25 : vector<1x32xf32> to vector<32x32xf32>
    %29 = arith.addf %27, %28 : vector<32x32xf32>
    %cst_14 = arith.constant 0.000000e+00 : f32
    %30 = vector.broadcast %cst_14 : f32 to vector<32x32xf32>
    %31 = arith.maximumf %29, %30 : vector<32x32xf32>
    %32 = tpu.iota {dimensions = array<i32: 0>} : vector<32x32xi32>
    %c16_i32 = arith.constant 16 : i32
    %c0_i32 = arith.constant 0 : i32
    %33 = arith.cmpi eq, %c16_i32, %c0_i32 : i32
    %c1_i32 = arith.constant 1 : i32
    %34 = arith.select %33, %c1_i32, %c16_i32 : i32
    %35 = vector.broadcast %34 : i32 to vector<32x32xi32>
    %36 = arith.remsi %32, %35 : vector<32x32xi32>
    %c0_i32_15 = arith.constant 0 : i32
    %37 = vector.broadcast %c0_i32_15 : i32 to vector<32x32xi32>
    %38 = arith.cmpi ne, %36, %37 : vector<32x32xi32>
    %c0_i32_16 = arith.constant 0 : i32
    %39 = vector.broadcast %c0_i32_16 : i32 to vector<32x32xi32>
    %40 = arith.cmpi slt, %36, %39 : vector<32x32xi32>
    %c0_i32_17 = arith.constant 0 : i32
    %41 = arith.cmpi slt, %34, %c0_i32_17 : i32
    %42 = vector.broadcast %41 : i1 to vector<32x32xi1>
    %43 = vector.broadcast %42 : vector<32x32xi1> to vector<32x32xi1>
    %44 = arith.xori %40, %43 : vector<32x32xi1>
    %45 = arith.andi %44, %38 : vector<32x32xi1>
    %46 = vector.broadcast %34 : i32 to vector<32x32xi32>
    %47 = arith.addi %36, %46 : vector<32x32xi32>
    %48 = arith.select %45, %47, %36 : vector<32x32xi1>, vector<32x32xi32>
    %c0_i32_18 = arith.constant 0 : i32
    %49 = vector.broadcast %c0_i32_18 : i32 to vector<32x32xi32>
    %50 = arith.cmpi eq, %48, %49 : vector<32x32xi32>
    %c1_i32_19 = arith.constant 1 : i32
    %51 = tpu.dynamic_rotate %31 by %c1_i32_19 dim 0 : vector<32x32xf32>, i32 -> vector<32x32xf32>
    %cst_20 = arith.constant 0.000000e+00 : f32
    %52 = vector.broadcast %cst_20 : f32 to vector<32x32xf32>
    %53 = arith.select %50, %52, %51 : vector<32x32xi1>, vector<32x32xf32>
    %c15_i32 = arith.constant 15 : i32
    %54 = vector.broadcast %c15_i32 : i32 to vector<32x32xi32>
    %55 = arith.cmpi eq, %48, %54 : vector<32x32xi32>
    %c31_i32 = arith.constant 31 : i32
    %56 = tpu.dynamic_rotate %31 by %c31_i32 dim 0 : vector<32x32xf32>, i32 -> vector<32x32xf32>
    %cst_21 = arith.constant 0.000000e+00 : f32
    %57 = vector.broadcast %cst_21 : f32 to vector<32x32xf32>
    %58 = arith.select %55, %57, %56 : vector<32x32xi1>, vector<32x32xf32>
    %59 = tpu.concatenate %53, %31, %58 in 1 : vector<32x32xf32>, vector<32x32xf32>, vector<32x32xf32> -> vector<32x96xf32>
    %60 = arith.truncf %59 : vector<32x96xf32> to vector<32x96xbf16>
    %c0_22 = arith.constant 0 : index
    %c0_23 = arith.constant 0 : index
    %61 = vector.load %arg2[%c0_22, %c0_23] : memref<96x32xbf16, #tpu.memory_space<vmem>>, vector<96x32xbf16>
    %cst_24 = arith.constant dense<0.000000e+00> : vector<32x32xf32>
    %62 = tpu.matmul %60, %61, %cst_24 {dimension_numbers = #tpu.dot_dimension_numbers<[1], [0], [0], [1], [0, 0, 1, 1], [], []>} : vector<32x96xbf16>, vector<96x32xbf16>, vector<32x32xf32> -> vector<32x32xf32>
    %c0_25 = arith.constant 0 : index
    %c0_26 = arith.constant 0 : index
    %63 = vector.load %arg7[%c0_25, %c0_26] : memref<1x32xf32, #tpu.memory_space<vmem>>, vector<1x32xf32>
    %c0_27 = arith.constant 0 : index
    %c0_28 = arith.constant 0 : index
    %64 = vector.load %arg8[%c0_27, %c0_28] : memref<1x32xf32, #tpu.memory_space<vmem>>, vector<1x32xf32>
    %cst_29 = arith.constant dense<0.000000e+00> : vector<32xf32>
    %65 = vector.multi_reduction <add>, %62, %cst_29 [0] : vector<32x32xf32> to vector<32xf32>
    %66 = vector.shape_cast %65 : vector<32xf32> to vector<1x32xf32>
    %cst_30 = arith.constant 3.200000e+01 : f32
    %67 = vector.broadcast %cst_30 : f32 to vector<1x32xf32>
    %68 = arith.divf %66, %67 : vector<1x32xf32>
    %69 = arith.mulf %62, %62 : vector<32x32xf32>
    %cst_31 = arith.constant dense<0.000000e+00> : vector<32xf32>
    %70 = vector.multi_reduction <add>, %69, %cst_31 [0] : vector<32x32xf32> to vector<32xf32>
    %71 = vector.shape_cast %70 : vector<32xf32> to vector<1x32xf32>
    %cst_32 = arith.constant 3.200000e+01 : f32
    %72 = vector.broadcast %cst_32 : f32 to vector<1x32xf32>
    %73 = arith.divf %71, %72 : vector<1x32xf32>
    %74 = arith.mulf %68, %68 : vector<1x32xf32>
    %75 = arith.subf %73, %74 : vector<1x32xf32>
    %cst_33 = arith.constant 0.000000e+00 : f32
    %76 = vector.broadcast %cst_33 : f32 to vector<1x32xf32>
    %77 = arith.maximumf %75, %76 : vector<1x32xf32>
    %cst_34 = arith.constant 9.99999974E-6 : f32
    %78 = vector.broadcast %cst_34 : f32 to vector<1x32xf32>
    %79 = arith.addf %77, %78 : vector<1x32xf32>
    %80 = math.rsqrt %79 : vector<1x32xf32>
    %81 = arith.mulf %63, %80 : vector<1x32xf32>
    %82 = arith.mulf %68, %81 : vector<1x32xf32>
    %83 = arith.subf %64, %82 : vector<1x32xf32>
    %84 = vector.broadcast %81 : vector<1x32xf32> to vector<32x32xf32>
    %85 = arith.mulf %62, %84 : vector<32x32xf32>
    %86 = vector.broadcast %83 : vector<1x32xf32> to vector<32x32xf32>
    %87 = arith.addf %85, %86 : vector<32x32xf32>
    %cst_35 = arith.constant 0.000000e+00 : f32
    %88 = vector.broadcast %cst_35 : f32 to vector<32x32xf32>
    %89 = arith.maximumf %87, %88 : vector<32x32xf32>
    %90 = arith.truncf %89 : vector<32x32xf32> to vector<32x32xbf16>
    %c0_36 = arith.constant 0 : index
    %c0_37 = arith.constant 0 : index
    %91 = vector.load %arg3[%c0_36, %c0_37] : memref<32x128xbf16, #tpu.memory_space<vmem>>, vector<32x128xbf16>
    %cst_38 = arith.constant dense<0.000000e+00> : vector<32x128xf32>
    %92 = tpu.matmul %90, %91, %cst_38 {dimension_numbers = #tpu.dot_dimension_numbers<[1], [0], [0], [1], [0, 0, 1, 1], [], []>} : vector<32x32xbf16>, vector<32x128xbf16>, vector<32x128xf32> -> vector<32x128xf32>
    %c0_39 = arith.constant 0 : index
    %c0_40 = arith.constant 0 : index
    %93 = vector.load %arg9[%c0_39, %c0_40] : memref<1x128xf32, #tpu.memory_space<vmem>>, vector<1x128xf32>
    %c0_41 = arith.constant 0 : index
    %c0_42 = arith.constant 0 : index
    %94 = vector.load %arg10[%c0_41, %c0_42] : memref<1x128xf32, #tpu.memory_space<vmem>>, vector<1x128xf32>
    %cst_43 = arith.constant dense<0.000000e+00> : vector<128xf32>
    %95 = vector.multi_reduction <add>, %92, %cst_43 [0] : vector<32x128xf32> to vector<128xf32>
    %96 = vector.shape_cast %95 : vector<128xf32> to vector<1x128xf32>
    %cst_44 = arith.constant 3.200000e+01 : f32
    %97 = vector.broadcast %cst_44 : f32 to vector<1x128xf32>
    %98 = arith.divf %96, %97 : vector<1x128xf32>
    %99 = arith.mulf %92, %92 : vector<32x128xf32>
    %cst_45 = arith.constant dense<0.000000e+00> : vector<128xf32>
    %100 = vector.multi_reduction <add>, %99, %cst_45 [0] : vector<32x128xf32> to vector<128xf32>
    %101 = vector.shape_cast %100 : vector<128xf32> to vector<1x128xf32>
    %cst_46 = arith.constant 3.200000e+01 : f32
    %102 = vector.broadcast %cst_46 : f32 to vector<1x128xf32>
    %103 = arith.divf %101, %102 : vector<1x128xf32>
    %104 = arith.mulf %98, %98 : vector<1x128xf32>
    %105 = arith.subf %103, %104 : vector<1x128xf32>
    %cst_47 = arith.constant 0.000000e+00 : f32
    %106 = vector.broadcast %cst_47 : f32 to vector<1x128xf32>
    %107 = arith.maximumf %105, %106 : vector<1x128xf32>
    %cst_48 = arith.constant 9.99999974E-6 : f32
    %108 = vector.broadcast %cst_48 : f32 to vector<1x128xf32>
    %109 = arith.addf %107, %108 : vector<1x128xf32>
    %110 = math.rsqrt %109 : vector<1x128xf32>
    %111 = arith.mulf %93, %110 : vector<1x128xf32>
    %112 = arith.mulf %98, %111 : vector<1x128xf32>
    %113 = arith.subf %94, %112 : vector<1x128xf32>
    %114 = vector.broadcast %111 : vector<1x128xf32> to vector<32x128xf32>
    %115 = arith.mulf %92, %114 : vector<32x128xf32>
    %116 = vector.broadcast %113 : vector<1x128xf32> to vector<32x128xf32>
    %117 = arith.addf %115, %116 : vector<32x128xf32>
    %c0_49 = arith.constant 0 : index
    %c0_50 = arith.constant 0 : index
    %118 = vector.load %arg4[%c0_49, %c0_50] : memref<64x128xbf16, #tpu.memory_space<vmem>>, vector<64x128xbf16>
    %cst_51 = arith.constant dense<0.000000e+00> : vector<32x128xf32>
    %119 = tpu.matmul %2, %118, %cst_51 {dimension_numbers = #tpu.dot_dimension_numbers<[1], [0], [0], [1], [0, 0, 1, 1], [], []>} : vector<32x64xbf16>, vector<64x128xbf16>, vector<32x128xf32> -> vector<32x128xf32>
    %c0_52 = arith.constant 0 : index
    %c0_53 = arith.constant 0 : index
    %120 = vector.load %arg11[%c0_52, %c0_53] : memref<1x128xf32, #tpu.memory_space<vmem>>, vector<1x128xf32>
    %c0_54 = arith.constant 0 : index
    %c0_55 = arith.constant 0 : index
    %121 = vector.load %arg12[%c0_54, %c0_55] : memref<1x128xf32, #tpu.memory_space<vmem>>, vector<1x128xf32>
    %cst_56 = arith.constant dense<0.000000e+00> : vector<128xf32>
    %122 = vector.multi_reduction <add>, %119, %cst_56 [0] : vector<32x128xf32> to vector<128xf32>
    %123 = vector.shape_cast %122 : vector<128xf32> to vector<1x128xf32>
    %cst_57 = arith.constant 3.200000e+01 : f32
    %124 = vector.broadcast %cst_57 : f32 to vector<1x128xf32>
    %125 = arith.divf %123, %124 : vector<1x128xf32>
    %126 = arith.mulf %119, %119 : vector<32x128xf32>
    %cst_58 = arith.constant dense<0.000000e+00> : vector<128xf32>
    %127 = vector.multi_reduction <add>, %126, %cst_58 [0] : vector<32x128xf32> to vector<128xf32>
    %128 = vector.shape_cast %127 : vector<128xf32> to vector<1x128xf32>
    %cst_59 = arith.constant 3.200000e+01 : f32
    %129 = vector.broadcast %cst_59 : f32 to vector<1x128xf32>
    %130 = arith.divf %128, %129 : vector<1x128xf32>
    %131 = arith.mulf %125, %125 : vector<1x128xf32>
    %132 = arith.subf %130, %131 : vector<1x128xf32>
    %cst_60 = arith.constant 0.000000e+00 : f32
    %133 = vector.broadcast %cst_60 : f32 to vector<1x128xf32>
    %134 = arith.maximumf %132, %133 : vector<1x128xf32>
    %cst_61 = arith.constant 9.99999974E-6 : f32
    %135 = vector.broadcast %cst_61 : f32 to vector<1x128xf32>
    %136 = arith.addf %134, %135 : vector<1x128xf32>
    %137 = math.rsqrt %136 : vector<1x128xf32>
    %138 = arith.mulf %120, %137 : vector<1x128xf32>
    %139 = arith.mulf %125, %138 : vector<1x128xf32>
    %140 = arith.subf %121, %139 : vector<1x128xf32>
    %141 = vector.broadcast %138 : vector<1x128xf32> to vector<32x128xf32>
    %142 = arith.mulf %119, %141 : vector<32x128xf32>
    %143 = vector.broadcast %140 : vector<1x128xf32> to vector<32x128xf32>
    %144 = arith.addf %142, %143 : vector<32x128xf32>
    %145 = arith.addf %117, %144 : vector<32x128xf32>
    %cst_62 = arith.constant 0.000000e+00 : f32
    %146 = vector.broadcast %cst_62 : f32 to vector<32x128xf32>
    %147 = arith.maximumf %145, %146 : vector<32x128xf32>
    %148 = vector.shape_cast %147 : vector<32x128xf32> to vector<2x16x128xf32>
    %c0_63 = arith.constant 0 : index
    %c0_64 = arith.constant 0 : index
    %c0_65 = arith.constant 0 : index
    %149 = vector.load %arg13[%c0_63, %c0_64, %c0_65] : memref<2x16x128xf32, #tpu.memory_space<vmem>>, vector<2x16x128xf32>
    tpu.vector_store %arg13[%c0_63, %c0_64, %c0_65], %148 {strides = array<i32>} : memref<2x16x128xf32, #tpu.memory_space<vmem>>, vector<2x16x128xf32>,
    return
  }
}

</mosaic_0001>

<llo_original>
// kernel: tpu_custom_call.1
$region0: #{tpu_custom_call.1}
  #allocation0 [shape = 'u32[]', space=smem, size = 0x4, offset = 0x4, fixed_abs, tag = 'smem constant byte address 0x4 - core index']
  #allocation1 [shape = 'u32[144,128]{1,0:T(1,128)}', space=vmem, size = 0x12000, scoped, tag = 'internal scratch']
  %s0 = inlined_call_operand.vmem [shape: f32[2,16,64], index: 0, kind: input, shape index: {}]
  %s1 = inlined_call_operand.vmem [shape: bf16[64,32], index: 1, kind: input, shape index: {}]
  %s2 = inlined_call_operand.vmem [shape: bf16[96,32], index: 2, kind: input, shape index: {}]
  %s3 = inlined_call_operand.vmem [shape: bf16[32,128], index: 3, kind: input, shape index: {}]
  %s4 = inlined_call_operand.vmem [shape: bf16[64,128], index: 4, kind: input, shape index: {}]
  %s5 = inlined_call_operand.vmem [shape: f32[1,32], index: 5, kind: input, shape index: {}]
  %s6 = inlined_call_operand.vmem [shape: f32[1,32], index: 6, kind: input, shape index: {}]
  %s7 = inlined_call_operand.vmem [shape: f32[1,32], index: 7, kind: input, shape index: {}]
  %s8 = inlined_call_operand.vmem [shape: f32[1,32], index: 8, kind: input, shape index: {}]
  %s9 = inlined_call_operand.vmem [shape: f32[1,128], index: 9, kind: input, shape index: {}]
  %s10 = inlined_call_operand.vmem [shape: f32[1,128], index: 10, kind: input, shape index: {}]
  %s11 = inlined_call_operand.vmem [shape: f32[1,128], index: 11, kind: input, shape index: {}]
  %s12 = inlined_call_operand.vmem [shape: f32[1,128], index: 12, kind: input, shape index: {}]
  %s13 = inlined_call_operand.hbm [shape: f32[2,16,128], index: 13, kind: output, shape index: {}]
  %s14 = sld [smem:[#allocation0]]
  $region62: #{tpu_custom_call.1} parent=0
    _
  %s16 = ssub.s32 1, %s14
  %s17 = scalar_select 0, %s16, %s14
  $region1: #{tpu_custom_call.1} parent=0
    #allocation2 [shape = 'u8[16384]{0}', space=vmem, size = 0x4000, scoped, tag = 'output window, operand 0, single buffered']
    #allocation3 [shape = 's32[1]{0}', space=sflag, size = 0x4, scoped, tag = 'scoped memory for tpu_custom_call.1']
    %18 = vsyncpa [#allocation3], 0
    // Predicated region
    $region2: #{tpu_custom_call.1} parent=1 // pred_check
      _
    $region3: #{tpu_custom_call.1} parent=1 // pred_check_branch
      %20 = sbr.rel (0) target = $region5
    $region4: #{tpu_custom_call.1} parent=1 // pred_region
      _
    $region5: #{tpu_custom_call.1} parent=1 // pred_fallthru
      _
    // Predicated region
    $region6: #{tpu_custom_call.1} parent=1 // pred_check
      _
    $region7: #{tpu_custom_call.1} parent=1 // pred_check_branch
      %22 = sbr.rel (0) target = $region9
    $region8: #{tpu_custom_call.1} parent=1 // pred_region
      _
    $region9: #{tpu_custom_call.1} parent=1 // pred_fallthru
      _
    // Predicated region
    $region10: #{tpu_custom_call.1} parent=1 // pred_check
      _
    $region11: #{tpu_custom_call.1} parent=1 // pred_check_branch
      %24 = sbr.rel (0) target = $region13
    $region12: #{tpu_custom_call.1} parent=1 // pred_region
      _
    $region13: #{tpu_custom_call.1} parent=1 // pred_fallthru
      _
    // Predicated region
    $region14: #{tpu_custom_call.1} parent=1 // pred_check
      _
    $region15: #{tpu_custom_call.1} parent=1 // pred_check_branch
      %26 = sbr.rel (0) target = $region17
    $region16: #{tpu_custom_call.1} parent=1 // pred_region
      _
    $region17: #{tpu_custom_call.1} parent=1 // pred_fallthru
      _
    // Predicated region
    $region18: #{tpu_custom_call.1} parent=1 // pred_check
      _
    $region19: #{tpu_custom_call.1} parent=1 // pred_check_branch
      %28 = sbr.rel (0) target = $region21
    $region20: #{tpu_custom_call.1} parent=1 // pred_region
      _
    $region21: #{tpu_custom_call.1} parent=1 // pred_fallthru
      _
    // Predicated region
    $region22: #{tpu_custom_call.1} parent=1 // pred_check
      _
    $region23: #{tpu_custom_call.1} parent=1 // pred_check_branch
      %30 = sbr.rel (0) target = $region25
    $region24: #{tpu_custom_call.1} parent=1 // pred_region
      _
    $region25: #{tpu_custom_call.1} parent=1 // pred_fallthru
      _
    // Predicated region
    $region26: #{tpu_custom_call.1} parent=1 // pred_check
      _
    $region27: #{tpu_custom_call.1} parent=1 // pred_check_branch
      %32 = sbr.rel (0) target = $region29
    $region28: #{tpu_custom_call.1} parent=1 // pred_region
      _
    $region29: #{tpu_custom_call.1} parent=1 // pred_fallthru
      _
    // Predicated region
    $region30: #{tpu_custom_call.1} parent=1 // pred_check
      _
    $region31: #{tpu_custom_call.1} parent=1 // pred_check_branch
      %34 = sbr.rel (0) target = $region33
    $region32: #{tpu_custom_call.1} parent=1 // pred_region
      _
    $region33: #{tpu_custom_call.1} parent=1 // pred_fallthru
      _
    // Predicated region
    $region34: #{tpu_custom_call.1} parent=1 // pred_check
      _
    $region35: #{tpu_custom_call.1} parent=1 // pred_check_branch
      %36 = sbr.rel (0) target = $region37
    $region36: #{tpu_custom_call.1} parent=1 // pred_region
      _
    $region37: #{tpu_custom_call.1} parent=1 // pred_fallthru
      _
    // Predicated region
    $region38: #{tpu_custom_call.1} parent=1 // pred_check
      _
    $region39: #{tpu_custom_call.1} parent=1 // pred_check_branch
      %38 = sbr.rel (0) target = $region41
    $region40: #{tpu_custom_call.1} parent=1 // pred_region
      _
    $region41: #{tpu_custom_call.1} parent=1 // pred_fallthru
      _
    // Predicated region
    $region42: #{tpu_custom_call.1} parent=1 // pred_check
      _
    $region43: #{tpu_custom_call.1} parent=1 // pred_check_branch
      %40 = sbr.rel (0) target = $region45
    $region44: #{tpu_custom_call.1} parent=1 // pred_region
      _
    $region45: #{tpu_custom_call.1} parent=1 // pred_fallthru
      _
    // Predicated region
    $region46: #{tpu_custom_call.1} parent=1 // pred_check
      _
    $region47: #{tpu_custom_call.1} parent=1 // pred_check_branch
      %42 = sbr.rel (0) target = $region49
    $region48: #{tpu_custom_call.1} parent=1 // pred_region
      _
    $region49: #{tpu_custom_call.1} parent=1 // pred_fallthru
      _
    // Predicated region
    $region50: #{tpu_custom_call.1} parent=1 // pred_check
      _
    $region51: #{tpu_custom_call.1} parent=1 // pred_check_branch
      %44 = sbr.rel (0) target = $region53
    $region52: #{tpu_custom_call.1} parent=1 // pred_region
      _
    $region53: #{tpu_custom_call.1} parent=1 // pred_fallthru
      _
    %v46 = vld [vmem:[%s0] sm:$0xff]
    %v47 = vld [vmem:[%s0 + $0x8] sm:$0xff]
    %v48 = vld [vmem:[%s0 + $0x10] sm:$0xff]
    %v49 = vld [vmem:[%s0 + $0x18] sm:$0xff]
    %v50 = vpack.c.bf16 %v47, %v46
    %v51 = vpack.c.bf16 %v49, %v48
    %v52 = vld [vmem:[%s1] sm:$0xf]
    %v53 = vld [vmem:[%s1 + $0x4] sm:$0xf]
    %v54 = vld [vmem:[%s1 + $0x8] sm:$0xf]
    %v55 = vld [vmem:[%s1 + $0xc] sm:$0xf]
    %v56 = vld [vmem:[%s1 + $0x10] sm:$0xf]
    %v57 = vld [vmem:[%s1 + $0x14] sm:$0xf]
    %v58 = vld [vmem:[%s1 + $0x18] sm:$0xf]
    %v59 = vld [vmem:[%s1 + $0x1c] sm:$0xf]
    %v68 = vunpack.c.l.b16 %v52
    %v69 = vunpack.c.l.b16 %v53
    %v70 = vunpack.c.l.b16 %v54
    %v71 = vunpack.c.l.b16 %v55
    %v72 = vunpack.c.l.b16 %v56
    %v73 = vunpack.c.l.b16 %v57
    %v74 = vunpack.c.l.b16 %v58
    %v75 = vunpack.c.l.b16 %v59
    %v76 = vpack.c.b16 %v69, %v68
    %v77 = vpack.c.b16 %v71, %v70
    %v78 = vpack.c.b16 %v73, %v72
    %v79 = vpack.c.b16 %v75, %v74
    %vm84 = vcmask 523264
    %v86 = vsel %vm84, %v50, 0
    %v89 = vsel %vm84, %v51, 0
    %91 = vmatprep.subr.bf16.mxu0 0
    %92 = vmatpush1.bf16.msra.mxu0 %v76
    %93 = vmatprep.subr.bf16.mxu0 0
    %94 = vmatpush1.bf16.msra.mxu0 %v77
    %95 = vmatprep.subr.bf16.mxu0 0
    %96 = vmatpush1.bf16.msra.mxu0 %v78
    %97 = vmatprep.subr.bf16.mxu0 0
    %98 = vmatpush1.bf16.msra.mxu0 %v79
    %99 = vmatprep.subr.bf16.mxu0 0
    %100 = vmatpush1.bf16.msra.mxu0 0
    %101 = vmatprep.subr.bf16.mxu0 0
    %102 = vmatpush1.bf16.msra.mxu0 0
    %103 = vmatprep.subr.bf16.mxu0 0
    %104 = vmatpush1.bf16.msra.mxu0 0
    %105 = vmatprep.subr.bf16.mxu0 0
    %106 = vmatpush1.bf16.msra.mxu0 0
    %107 = vmatprep.subr.bf16.mxu0 0
    %108 = vmatpush1.bf16.msra.mxu0 0
    %109 = vmatprep.subr.bf16.mxu0 0
    %110 = vmatpush1.bf16.msra.mxu0 0
    %111 = vmatprep.subr.bf16.mxu0 0
    %112 = vmatpush1.bf16.msra.mxu0 0
    %113 = vmatprep.subr.bf16.mxu0 0
    %114 = vmatpush1.bf16.msra.mxu0 0
    %115 = vmatprep.subr.bf16.mxu0 0
    %116 = vmatpush1.bf16.msra.mxu0 0
    %117 = vmatprep.subr.bf16.mxu0 0
    %118 = vmatpush1.bf16.msra.mxu0 0
    %119 = vmatprep.subr.bf16.mxu0 0
    %120 = vmatpush1.bf16.msra.mxu0 0
    %121 = vmatprep.subr.bf16.mxu0 0
    %122 = vmatpush1.bf16.msra.mxu0 0
    %123 = vmatprep.mubr.bf16.mxu0 0
    %124 = vmatmul.mubr.bf16.gmra.mrb[0].mxu0 %v86
    %v125 = vpop.f32.mrb[0].mxu0
    %v126 = vadd.f32 0.0, %v125
    %v127 = vpop.f32.mrb[0].mxu0
    %v128 = vpop.f32.mrb[0].mxu0
    %v129 = vadd.f32 0.0, %v128
    %v130 = vpop.f32.mrb[0].mxu0
    %131 = vmatprep.mubr.bf16.mxu0 0
    %132 = vmatmul.mubr.bf16.gmra.mrb[0].mxu0 %v89
    %v133 = vpop.f32.mrb[0].mxu0
    %v134 = vadd.f32 0.0, %v133
    %v135 = vpop.f32.mrb[0].mxu0
    %v136 = vpop.f32.mrb[0].mxu0
    %v137 = vadd.f32 0.0, %v136
    %v138 = vpop.f32.mrb[0].mxu0
    %139 = vdwg.mxu0
    %v140 = vld [vmem:[%s5] sm:$0x1]
    %v141 = vld [vmem:[%s6] sm:$0x1]
    %vm142 = vcmask 261120
    %v143 = vsel %vm142, %v126, 0.0
    %v144 = vsel %vm142, %v129, 0.0
    %v145 = vadd.f32 %v143, %v144
    %v146 = vsel %vm142, %v134, 0.0
    %v147 = vadd.f32 %v145, %v146
    %v148 = vsel %vm142, %v137, 0.0
    %v149 = vadd.f32 %v147, %v148
    %v150 = vrot.slane %v149, 4
    %v151 = vadd.f32 %v149, %v150
    %v152 = vrot.slane %v151, 2
    %v153 = vadd.f32 %v151, %v152
    %v154 = vrot.slane %v153, 1
    %v155 = vadd.f32 %v153, %v154
    %v156 = vrcp.pop 32.0
    %v157 = vmul.f32 %v155, %v156
    %v158 = vmul.f32 %v126, %v126
    %v159 = vmul.f32 %v129, %v129
    %v160 = vmul.f32 %v134, %v134
    %v161 = vmul.f32 %v137, %v137
    %v162 = vsel %vm142, %v158, 0.0
    %v163 = vsel %vm142, %v159, 0.0
    %v164 = vadd.f32 %v162, %v163
    %v165 = vsel %vm142, %v160, 0.0
    %v166 = vadd.f32 %v164, %v165
    %v167 = vsel %vm142, %v161, 0.0
    %v168 = vadd.f32 %v166, %v167
    %v169 = vrot.slane %v168, 4
    %v170 = vadd.f32 %v168, %v169
    %v171 = vrot.slane %v170, 2
    %v172 = vadd.f32 %v170, %v171
    %v173 = vrot.slane %v172, 1
    %v174 = vadd.f32 %v172, %v173
    %v175 = vmul.f32 %v174, %v156
    %v176 = vmul.f32 %v157, %v157
    %v177 = vsub.f32 %v175, %v176
    %v178 = vmax.f32 %v177, 0.0
    %v179 = vadd.f32 %v178, 1e-05
    %v180 = vrsqrt.pop %v179
    %v181 = vmul.f32 %v140, %v180
    %v182 = vmul.f32 %v157, %v181
    %v183 = vsub.f32 %v141, %v182
    %v185 = vlaneseq
    %v186 = vshrl.u32 %v185, 7
    %v187 = vsub.s32 0, %v186
    %v188 = vrot.slane %v181, %v187
    %v190 = vmul.f32 %v126, %v188
    %v191 = vmul.f32 %v129, %v188
    %v192 = vmul.f32 %v134, %v188
    %v193 = vmul.f32 %v137, %v188
    %v195 = vlaneseq
    %v196 = vshrl.u32 %v195, 7
    %v197 = vsub.s32 0, %v196
    %v198 = vrot.slane %v183, %v197
    %v200 = vadd.f32 %v190, %v198
    %v201 = vadd.f32 %v191, %v198
    %v202 = vadd.f32 %v192, %v198
    %v203 = vadd.f32 %v193, %v198
    %v204 = vmax.f32 %v200, 0.0
    %v205 = vmax.f32 %v201, 0.0
    %v206 = vmax.f32 %v202, 0.0
    %v207 = vmax.f32 %v203, 0.0
    %v208 = vlaneseq
    %v209 = vshrl.u32 %v208, 7
    %v210 = vadd.s32 %v209, 8
    %v211 = vadd.s32 %v209, 16
    %v212 = vadd.s32 %v209, 24
    %vm213 = vcmp.lt.s32.totalorder %v209, 0
    %v214 = vsub.s32 0, %v209
    %v215 = vsel %vm213, %v214, %v209
    %v216 = vshrl.u32 %v215, 4
    %v217 = vand.u32 %v215, 15
    %v218 = vsub.s32 0, %v217
    %v219 = vsel %vm213, %v218, %v217
    %vm220 = vcmp.lt.s32.totalorder %v210, 0
    %v221 = vsub.s32 0, %v210
    %v222 = vsel %vm220, %v221, %v210
    %v223 = vshrl.u32 %v222, 4
    %v224 = vand.u32 %v222, 15
    %v225 = vsub.s32 0, %v224
    %v226 = vsel %vm220, %v225, %v224
    %vm227 = vcmp.lt.s32.totalorder %v211, 0
    %v228 = vsub.s32 0, %v211
    %v229 = vsel %vm227, %v228, %v211
    %v230 = vshrl.u32 %v229, 4
    %v231 = vand.u32 %v229, 15
    %v232 = vsub.s32 0, %v231
    %v233 = vsel %vm227, %v232, %v231
    %vm234 = vcmp.lt.s32.totalorder %v212, 0
    %v235 = vsub.s32 0, %v212
    %v236 = vsel %vm234, %v235, %v212
    %v237 = vshrl.u32 %v236, 4
    %v238 = vand.u32 %v236, 15
    %v239 = vsub.s32 0, %v238
    %v240 = vsel %vm234, %v239, %v238
    %vm241 = vcmp.ne.s32.totalorder %v219, 0
    %vm242 = vcmp.ne.s32.totalorder %v226, 0
    %vm243 = vcmp.ne.s32.totalorder %v233, 0
    %vm244 = vcmp.ne.s32.totalorder %v240, 0
    %vm245 = vcmp.lt.s32.totalorder %v219, 0
    %vm246 = vcmp.lt.s32.totalorder %v226, 0
    %vm247 = vcmp.lt.s32.totalorder %v233, 0
    %vm248 = vcmp.lt.s32.totalorder %v240, 0
    %vm249 = vmand %vm245, %vm241
    %vm250 = vmand %vm246, %vm242
    %vm251 = vmand %vm247, %vm243
    %vm252 = vmand %vm248, %vm244
    %v253 = vadd.s32 %v219, 16
    %v254 = vadd.s32 %v226, 16
    %v255 = vadd.s32 %v233, 16
    %v256 = vadd.s32 %v240, 16
    %v257 = vsel %vm249, %v253, %v219
    %v258 = vsel %vm250, %v254, %v226
    %v259 = vsel %vm251, %v255, %v233
    %v260 = vsel %vm252, %v256, %v240
    %vm261 = vcmp.eq.s32.totalorder %v257, 0
    %vm262 = vcmp.eq.s32.totalorder %v258, 0
    %vm263 = vcmp.eq.s32.totalorder %v259, 0
    %vm264 = vcmp.eq.s32.totalorder %v260, 0
    %v265 = vrot.slane %v204, 7
    %v266 = vrot.slane %v205, 7
    %v267 = vrot.slane %v206, 7
    %v268 = vrot.slane %v207, 7
    %vm269 = vcmp.lt.s32.totalorder %v209, 1
    %v270 = vsel %vm269, %v267, %v268
    %v271 = vsel %vm269, %v266, %v267
    %v272 = vsel %vm269, %v265, %v266
    %v273 = vsel %vm269, %v268, %v265
    %v274 = vsel %vm261, 0.0, %v273
    %v275 = vsel %vm262, 0.0, %v272
    %v276 = vsel %vm263, 0.0, %v271
    %v277 = vsel %vm264, 0.0, %v270
    %vm278 = vcmp.eq.s32.totalorder %v257, 15
    %vm279 = vcmp.eq.s32.totalorder %v258, 15
    %vm280 = vcmp.eq.s32.totalorder %v259, 15
    %vm281 = vcmp.eq.s32.totalorder %v260, 15
    %v282 = vrot.slane %v204, 1
    %v283 = vrot.slane %v205, 1
    %v284 = vrot.slane %v206, 1
    %v285 = vrot.slane %v207, 1
    %vm286 = vcmp.lt.s32.totalorder %v209, 7
    %v287 = vsel %vm286, %v284, %v285
    %v288 = vsel %vm286, %v283, %v284
    %v289 = vsel %vm286, %v282, %v283
    %v290 = vsel %vm286, %v285, %v282
    %v291 = vsel %vm278, 0.0, %v289
    %v292 = vsel %vm279, 0.0, %v288
    %v293 = vsel %vm280, 0.0, %v287
    %v294 = vsel %vm281, 0.0, %v290
    %299 = vrot.lane.b32.xlu0 %v204, 32
    %v300 = vpop.permute.xlu0 %299
    %301 = vrot.lane.b32.xlu0 %v205, 32
    %v302 = vpop.permute.xlu0 %301
    %303 = vrot.lane.b32.xlu0 %v206, 32
    %v304 = vpop.permute.xlu0 %303
    %305 = vrot.lane.b32.xlu0 %v207, 32
    %v306 = vpop.permute.xlu0 %305
    %315 = vrot.lane.b32.xlu0 %v291, 64
    %v316 = vpop.permute.xlu0 %315
    %317 = vrot.lane.b32.xlu0 %v292, 64
    %v318 = vpop.permute.xlu0 %317
    %319 = vrot.lane.b32.xlu0 %v293, 64
    %v320 = vpop.permute.xlu0 %319
    %321 = vrot.lane.b32.xlu0 %v294, 64
    %v322 = vpop.permute.xlu0 %321
    %v327 = vsel %vm142, %v274, %v300
    %v328 = vsel %vm142, %v275, %v302
    %v329 = vsel %vm142, %v276, %v304
    %v330 = vsel %vm142, %v277, %v306
    %v331 = vsel %vm84, %v327, %v316
    %v332 = vsel %vm84, %v328, %v318
    %v333 = vsel %vm84, %v329, %v320
    %v334 = vsel %vm84, %v330, %v322
    %v335 = vpack.c.bf16 %v332, %v331
    %v336 = vpack.c.bf16 %v334, %v333
    %v337 = vld [vmem:[%s2] sm:$0xf]
    %v338 = vld [vmem:[%s2 + $0x4] sm:$0xf]
    %v339 = vld [vmem:[%s2 + $0x8] sm:$0xf]
    %v340 = vld [vmem:[%s2 + $0xc] sm:$0xf]
    %v341 = vld [vmem:[%s2 + $0x10] sm:$0xf]
    %v342 = vld [vmem:[%s2 + $0x14] sm:$0xf]
    %v343 = vld [vmem:[%s2 + $0x18] sm:$0xf]
    %v344 = vld [vmem:[%s2 + $0x1c] sm:$0xf]
    %v345 = vld [vmem:[%s2 + $0x20] sm:$0xf]
    %v346 = vld [vmem:[%s2 + $0x24] sm:$0xf]
    %v347 = vld [vmem:[%s2 + $0x28] sm:$0xf]
    %v348 = vld [vmem:[%s2 + $0x2c] sm:$0xf]
    %v361 = vunpack.c.l.b16 %v337
    %v362 = vunpack.c.l.b16 %v338
    %v363 = vunpack.c.l.b16 %v339
    %v364 = vunpack.c.l.b16 %v340
    %v365 = vunpack.c.l.b16 %v341
    %v366 = vunpack.c.l.b16 %v342
    %v367 = vunpack.c.l.b16 %v343
    %v368 = vunpack.c.l.b16 %v344
    %v369 = vunpack.c.l.b16 %v345
    %v370 = vunpack.c.l.b16 %v346
    %v371 = vunpack.c.l.b16 %v347
    %v372 = vunpack.c.l.b16 %v348
    %v373 = vpack.c.b16 %v362, %v361
    %v374 = vpack.c.b16 %v364, %v363
    %v375 = vpack.c.b16 %v366, %v365
    %v376 = vpack.c.b16 %v368, %v367
    %v377 = vpack.c.b16 %v370, %v369
    %v378 = vpack.c.b16 %v372, %v371
    %vm385 = vcmask 785408
    %v387 = vsel %vm385, %v335, 0
    %v390 = vsel %vm385, %v336, 0
    %392 = vmatprep.subr.bf16.mxu0 0
    %393 = vmatpush1.bf16.msra.mxu0 %v373
    %394 = vmatprep.subr.bf16.mxu0 0
    %395 = vmatpush1.bf16.msra.mxu0 %v374
    %396 = vmatprep.subr.bf16.mxu0 0
    %397 = vmatpush1.bf16.msra.mxu0 %v375
    %398 = vmatprep.subr.bf16.mxu0 0
    %399 = vmatpush1.bf16.msra.mxu0 %v376
    %400 = vmatprep.subr.bf16.mxu0 0
    %401 = vmatpush1.bf16.msra.mxu0 %v377
    %402 = vmatprep.subr.bf16.mxu0 0
    %403 = vmatpush1.bf16.msra.mxu0 %v378
    %404 = vmatprep.subr.bf16.mxu0 0
    %405 = vmatpush1.bf16.msra.mxu0 0
    %406 = vmatprep.subr.bf16.mxu0 0
    %407 = vmatpush1.bf16.msra.mxu0 0
    %408 = vmatprep.subr.bf16.mxu0 0
    %409 = vmatpush1.bf16.msra.mxu0 0
    %410 = vmatprep.subr.bf16.mxu0 0
    %411 = vmatpush1.bf16.msra.mxu0 0
    %412 = vmatprep.subr.bf16.mxu0 0
    %413 = vmatpush1.bf16.msra.mxu0 0
    %414 = vmatprep.subr.bf16.mxu0 0
    %415 = vmatpush1.bf16.msra.mxu0 0
    %416 = vmatprep.subr.bf16.mxu0 0
    %417 = vmatpush1.bf16.msra.mxu0 0
    %418 = vmatprep.subr.bf16.mxu0 0
    %419 = vmatpush1.bf16.msra.mxu0 0
    %420 = vmatprep.subr.bf16.mxu0 0
    %421 = vmatpush1.bf16.msra.mxu0 0
    %422 = vmatprep.subr.bf16.mxu0 0
    %423 = vmatpush1.bf16.msra.mxu0 0
    %424 = vmatprep.mubr.bf16.mxu0 0
    %425 = vmatmul.mubr.bf16.gmra.mrb[0].mxu0 %v387
    %v426 = vpop.f32.mrb[0].mxu0
    %v427 = vadd.f32 0.0, %v426
    %v428 = vpop.f32.mrb[0].mxu0
    %v429 = vpop.f32.mrb[0].mxu0
    %v430 = vadd.f32 0.0, %v429
    %v431 = vpop.f32.mrb[0].mxu0
    %432 = vmatprep.mubr.bf16.mxu0 0
    %433 = vmatmul.mubr.bf16.gmra.mrb[0].mxu0 %v390
    %v434 = vpop.f32.mrb[0].mxu0
    %v435 = vadd.f32 0.0, %v434
    %v436 = vpop.f32.mrb[0].mxu0
    %v437 = vpop.f32.mrb[0].mxu0
    %v438 = vadd.f32 0.0, %v437
    %v439 = vpop.f32.mrb[0].mxu0
    %440 = vdwg.mxu0
    %v441 = vld [vmem:[%s7] sm:$0x1]
    %v442 = vld [vmem:[%s8] sm:$0x1]
    %v443 = vsel %vm142, %v427, 0.0
    %v444 = vsel %vm142, %v430, 0.0
    %v445 = vadd.f32 %v443, %v444
    %v446 = vsel %vm142, %v435, 0.0
    %v447 = vadd.f32 %v445, %v446
    %v448 = vsel %vm142, %v438, 0.0
    %v449 = vadd.f32 %v447, %v448
    %v450 = vrot.slane %v449, 4
    %v451 = vadd.f32 %v449, %v450
    %v452 = vrot.slane %v451, 2
    %v453 = vadd.f32 %v451, %v452
    %v454 = vrot.slane %v453, 1
    %v455 = vadd.f32 %v453, %v454
    %v456 = vmul.f32 %v455, %v156
    %v457 = vmul.f32 %v427, %v427
    %v458 = vmul.f32 %v430, %v430
    %v459 = vmul.f32 %v435, %v435
    %v460 = vmul.f32 %v438, %v438
    %v461 = vsel %vm142, %v457, 0.0
    %v462 = vsel %vm142, %v458, 0.0
    %v463 = vadd.f32 %v461, %v462
    %v464 = vsel %vm142, %v459, 0.0
    %v465 = vadd.f32 %v463, %v464
    %v466 = vsel %vm142, %v460, 0.0
    %v467 = vadd.f32 %v465, %v466
    %v468 = vrot.slane %v467, 4
    %v469 = vadd.f32 %v467, %v468
    %v470 = vrot.slane %v469, 2
    %v471 = vadd.f32 %v469, %v470
    %v472 = vrot.slane %v471, 1
    %v473 = vadd.f32 %v471, %v472
    %v474 = vmul.f32 %v473, %v156
    %v475 = vmul.f32 %v456, %v456
    %v476 = vsub.f32 %v474, %v475
    %v477 = vmax.f32 %v476, 0.0
    %v478 = vadd.f32 %v477, 1e-05
    %v479 = vrsqrt.pop %v478
    %v480 = vmul.f32 %v441, %v479
    %v481 = vmul.f32 %v456, %v480
    %v482 = vsub.f32 %v442, %v481
    %v484 = vlaneseq
    %v485 = vshrl.u32 %v484, 7
    %v486 = vsub.s32 0, %v485
    %v487 = vrot.slane %v480, %v486
    %v489 = vmul.f32 %v427, %v487
    %v490 = vmul.f32 %v430, %v487
    %v491 = vmul.f32 %v435, %v487
    %v492 = vmul.f32 %v438, %v487
    %v494 = vlaneseq
    %v495 = vshrl.u32 %v494, 7
    %v496 = vsub.s32 0, %v495
    %v497 = vrot.slane %v482, %v496
    %v499 = vadd.f32 %v489, %v497
    %v500 = vadd.f32 %v490, %v497
    %v501 = vadd.f32 %v491, %v497
    %v502 = vadd.f32 %v492, %v497
    %v503 = vmax.f32 %v499, 0.0
    %v504 = vmax.f32 %v500, 0.0
    %v505 = vmax.f32 %v501, 0.0
    %v506 = vmax.f32 %v502, 0.0
    %v507 = vpack.c.bf16 %v504, %v503
    %v508 = vpack.c.bf16 %v506, %v505
    %v509 = vld [vmem:[%s3] sm:$0xf]
    %v510 = vld [vmem:[%s3 + $0x4] sm:$0xf]
    %v511 = vld [vmem:[%s3 + $0x8] sm:$0xf]
    %v512 = vld [vmem:[%s3 + $0xc] sm:$0xf]
    %v517 = vunpack.c.l.b16 %v509
    %v518 = vunpack.c.l.b16 %v510
    %v519 = vunpack.c.l.b16 %v511
    %v520 = vunpack.c.l.b16 %v512
    %v521 = vpack.c.b16 %v518, %v517
    %v522 = vpack.c.b16 %v520, %v519
    %v526 = vsel %vm142, %v507, 0
    %v529 = vsel %vm142, %v508, 0
    %531 = vmatprep.subr.bf16.mxu0 0
    %532 = vmatpush1.bf16.msra.mxu0 %v521
    %533 = vmatprep.subr.bf16.mxu0 0
    %534 = vmatpush1.bf16.msra.mxu0 %v522
    %535 = vmatprep.subr.bf16.mxu0 0
    %536 = vmatpush1.bf16.msra.mxu0 0
    %537 = vmatprep.subr.bf16.mxu0 0
    %538 = vmatpush1.bf16.msra.mxu0 0
    %539 = vmatprep.subr.bf16.mxu0 0
    %540 = vmatpush1.bf16.msra.mxu0 0
    %541 = vmatprep.subr.bf16.mxu0 0
    %542 = vmatpush1.bf16.msra.mxu0 0
    %543 = vmatprep.subr.bf16.mxu0 0
    %544 = vmatpush1.bf16.msra.mxu0 0
    %545 = vmatprep.subr.bf16.mxu0 0
    %546 = vmatpush1.bf16.msra.mxu0 0
    %547 = vmatprep.subr.bf16.mxu0 0
    %548 = vmatpush1.bf16.msra.mxu0 0
    %549 = vmatprep.subr.bf16.mxu0 0
    %550 = vmatpush1.bf16.msra.mxu0 0
    %551 = vmatprep.subr.bf16.mxu0 0
    %552 = vmatpush1.bf16.msra.mxu0 0
    %553 = vmatprep.subr.bf16.mxu0 0
    %554 = vmatpush1.bf16.msra.mxu0 0
    %555 = vmatprep.subr.bf16.mxu0 0
    %556 = vmatpush1.bf16.msra.mxu0 0
    %557 = vmatprep.subr.bf16.mxu0 0
    %558 = vmatpush1.bf16.msra.mxu0 0
    %559 = vmatprep.subr.bf16.mxu0 0
    %560 = vmatpush1.bf16.msra.mxu0 0
    %561 = vmatprep.subr.bf16.mxu0 0
    %562 = vmatpush1.bf16.msra.mxu0 0
    %563 = vmatprep.mubr.bf16.mxu0 0
    %564 = vmatmul.mubr.bf16.gmra.mrb[0].mxu0 %v526
    %v565 = vpop.f32.mrb[0].mxu0
    %v566 = vadd.f32 0.0, %v565
    %v567 = vpop.f32.mrb[0].mxu0
    %v568 = vpop.f32.mrb[0].mxu0
    %v569 = vadd.f32 0.0, %v568
    %v570 = vpop.f32.mrb[0].mxu0
    %571 = vmatprep.mubr.bf16.mxu0 0
    %572 = vmatmul.mubr.bf16.gmra.mrb[0].mxu0 %v529
    %v573 = vpop.f32.mrb[0].mxu0
    %v574 = vadd.f32 0.0, %v573
    %v575 = vpop.f32.mrb[0].mxu0
    %v576 = vpop.f32.mrb[0].mxu0
    %v577 = vadd.f32 0.0, %v576
    %v578 = vpop.f32.mrb[0].mxu0
    %579 = vdwg.mxu0
    %v580 = vld [vmem:[%s9] sm:$0x1]
    %v581 = vld [vmem:[%s10] sm:$0x1]
    %v582 = vadd.f32 %v566, %v569
    %v583 = vadd.f32 %v582, %v574
    %v584 = vadd.f32 %v583, %v577
    %v585 = vrot.slane %v584, 4
    %v586 = vadd.f32 %v584, %v585
    %v587 = vrot.slane %v586, 2
    %v588 = vadd.f32 %v586, %v587
    %v589 = vrot.slane %v588, 1
    %v590 = vadd.f32 %v588, %v589
    %v591 = vmul.f32 %v590, %v156
    %v592 = vmul.f32 %v566, %v566
    %v593 = vmul.f32 %v569, %v569
    %v594 = vmul.f32 %v574, %v574
    %v595 = vmul.f32 %v577, %v577
    %v596 = vadd.f32 %v592, %v593
    %v597 = vadd.f32 %v596, %v594
    %v598 = vadd.f32 %v597, %v595
    %v599 = vrot.slane %v598, 4
    %v600 = vadd.f32 %v598, %v599
    %v601 = vrot.slane %v600, 2
    %v602 = vadd.f32 %v600, %v601
    %v603 = vrot.slane %v602, 1
    %v604 = vadd.f32 %v602, %v603
    %v605 = vmul.f32 %v604, %v156
    %v606 = vmul.f32 %v591, %v591
    %v607 = vsub.f32 %v605, %v606
    %v608 = vmax.f32 %v607, 0.0
    %v609 = vadd.f32 %v608, 1e-05
    %v610 = vrsqrt.pop %v609
    %v611 = vmul.f32 %v580, %v610
    %v612 = vmul.f32 %v591, %v611
    %v613 = vsub.f32 %v581, %v612
    %v615 = vlaneseq
    %v616 = vshrl.u32 %v615, 7
    %v617 = vsub.s32 0, %v616
    %v618 = vrot.slane %v611, %v617
    %v620 = vmul.f32 %v566, %v618
    %v621 = vmul.f32 %v569, %v618
    %v622 = vmul.f32 %v574, %v618
    %v623 = vmul.f32 %v577, %v618
    %v625 = vlaneseq
    %v626 = vshrl.u32 %v625, 7
    %v627 = vsub.s32 0, %v626
    %v628 = vrot.slane %v613, %v627
    %v630 = vadd.f32 %v620, %v628
    %v631 = vadd.f32 %v621, %v628
    %v632 = vadd.f32 %v622, %v628
    %v633 = vadd.f32 %v623, %v628
    %v634 = vld [vmem:[%s4] sm:$0xf]
    %v635 = vld [vmem:[%s4 + $0x4] sm:$0xf]
    %v636 = vld [vmem:[%s4 + $0x8] sm:$0xf]
    %v637 = vld [vmem:[%s4 + $0xc] sm:$0xf]
    %v638 = vld [vmem:[%s4 + $0x10] sm:$0xf]
    %v639 = vld [vmem:[%s4 + $0x14] sm:$0xf]
    %v640 = vld [vmem:[%s4 + $0x18] sm:$0xf]
    %v641 = vld [vmem:[%s4 + $0x1c] sm:$0xf]
    %v650 = vunpack.c.l.b16 %v634
    %v651 = vunpack.c.l.b16 %v635
    %v652 = vunpack.c.l.b16 %v636
    %v653 = vunpack.c.l.b16 %v637
    %v654 = vunpack.c.l.b16 %v638
    %v655 = vunpack.c.l.b16 %v639
    %v656 = vunpack.c.l.b16 %v640
    %v657 = vunpack.c.l.b16 %v641
    %v658 = vpack.c.b16 %v651, %v650
    %v659 = vpack.c.b16 %v653, %v652
    %v660 = vpack.c.b16 %v655, %v654
    %v661 = vpack.c.b16 %v657, %v656
    %666 = vmatprep.subr.bf16.mxu0 0
    %667 = vmatpush1.bf16.msra.mxu0 %v658
    %668 = vmatprep.subr.bf16.mxu0 0
    %669 = vmatpush1.bf16.msra.mxu0 %v659
    %670 = vmatprep.subr.bf16.mxu0 0
    %671 = vmatpush1.bf16.msra.mxu0 %v660
    %672 = vmatprep.subr.bf16.mxu0 0
    %673 = vmatpush1.bf16.msra.mxu0 %v661
    %674 = vmatprep.subr.bf16.mxu0 0
    %675 = vmatpush1.bf16.msra.mxu0 0
    %676 = vmatprep.subr.bf16.mxu0 0
    %677 = vmatpush1.bf16.msra.mxu0 0
    %678 = vmatprep.subr.bf16.mxu0 0
    %679 = vmatpush1.bf16.msra.mxu0 0
    %680 = vmatprep.subr.bf16.mxu0 0
    %681 = vmatpush1.bf16.msra.mxu0 0
    %682 = vmatprep.subr.bf16.mxu0 0
    %683 = vmatpush1.bf16.msra.mxu0 0
    %684 = vmatprep.subr.bf16.mxu0 0
    %685 = vmatpush1.bf16.msra.mxu0 0
    %686 = vmatprep.subr.bf16.mxu0 0
    %687 = vmatpush1.bf16.msra.mxu0 0
    %688 = vmatprep.subr.bf16.mxu0 0
    %689 = vmatpush1.bf16.msra.mxu0 0
    %690 = vmatprep.subr.bf16.mxu0 0
    %691 = vmatpush1.bf16.msra.mxu0 0
    %692 = vmatprep.subr.bf16.mxu0 0
    %693 = vmatpush1.bf16.msra.mxu0 0
    %694 = vmatprep.subr.bf16.mxu0 0
    %695 = vmatpush1.bf16.msra.mxu0 0
    %696 = vmatprep.subr.bf16.mxu0 0
    %697 = vmatpush1.bf16.msra.mxu0 0
    %698 = vmatprep.mubr.bf16.mxu0 0
    %699 = vmatmul.mubr.bf16.gmra.mrb[0].mxu0 %v86
    %v700 = vpop.f32.mrb[0].mxu0
    %v701 = vadd.f32 0.0, %v700
    %v702 = vpop.f32.mrb[0].mxu0
    %v703 = vpop.f32.mrb[0].mxu0
    %v704 = vadd.f32 0.0, %v703
    %v705 = vpop.f32.mrb[0].mxu0
    %706 = vmatprep.mubr.bf16.mxu0 0
    %707 = vmatmul.mubr.bf16.gmra.mrb[0].mxu0 %v89
    %v708 = vpop.f32.mrb[0].mxu0
    %v709 = vadd.f32 0.0, %v708
    %v710 = vpop.f32.mrb[0].mxu0
    %v711 = vpop.f32.mrb[0].mxu0
    %v712 = vadd.f32 0.0, %v711
    %v713 = vpop.f32.mrb[0].mxu0
    %714 = vdwg.mxu0
    %v715 = vld [vmem:[%s11] sm:$0x1]
    %v716 = vld [vmem:[%s12] sm:$0x1]
    %v717 = vadd.f32 %v701, %v704
    %v718 = vadd.f32 %v717, %v709
    %v719 = vadd.f32 %v718, %v712
    %v720 = vrot.slane %v719, 4
    %v721 = vadd.f32 %v719, %v720
    %v722 = vrot.slane %v721, 2
    %v723 = vadd.f32 %v721, %v722
    %v724 = vrot.slane %v723, 1
    %v725 = vadd.f32 %v723, %v724
    %v726 = vmul.f32 %v725, %v156
    %v727 = vmul.f32 %v701, %v701
    %v728 = vmul.f32 %v704, %v704
    %v729 = vmul.f32 %v709, %v709
    %v730 = vmul.f32 %v712, %v712
    %v731 = vadd.f32 %v727, %v728
    %v732 = vadd.f32 %v731, %v729
    %v733 = vadd.f32 %v732, %v730
    %v734 = vrot.slane %v733, 4
    %v735 = vadd.f32 %v733, %v734
    %v736 = vrot.slane %v735, 2
    %v737 = vadd.f32 %v735, %v736
    %v738 = vrot.slane %v737, 1
    %v739 = vadd.f32 %v737, %v738
    %v740 = vmul.f32 %v739, %v156
    %v741 = vmul.f32 %v726, %v726
    %v742 = vsub.f32 %v740, %v741
    %v743 = vmax.f32 %v742, 0.0
    %v744 = vadd.f32 %v743, 1e-05
    %v745 = vrsqrt.pop %v744
    %v746 = vmul.f32 %v715, %v745
    %v747 = vmul.f32 %v726, %v746
    %v748 = vsub.f32 %v716, %v747
    %v750 = vlaneseq
    %v751 = vshrl.u32 %v750, 7
    %v752 = vsub.s32 0, %v751
    %v753 = vrot.slane %v746, %v752
    %v755 = vmul.f32 %v701, %v753
    %v756 = vmul.f32 %v704, %v753
    %v757 = vmul.f32 %v709, %v753
    %v758 = vmul.f32 %v712, %v753
    %v760 = vlaneseq
    %v761 = vshrl.u32 %v760, 7
    %v762 = vsub.s32 0, %v761
    %v763 = vrot.slane %v748, %v762
    %v765 = vadd.f32 %v755, %v763
    %v766 = vadd.f32 %v756, %v763
    %v767 = vadd.f32 %v757, %v763
    %v768 = vadd.f32 %v758, %v763
    %v769 = vadd.f32 %v630, %v765
    %v770 = vadd.f32 %v631, %v766
    %v771 = vadd.f32 %v632, %v767
    %v772 = vadd.f32 %v633, %v768
    %v773 = vmax.f32 %v769, 0.0
    %v774 = vmax.f32 %v770, 0.0
    %v775 = vmax.f32 %v771, 0.0
    %v776 = vmax.f32 %v772, 0.0
    %777 = vst [vmem:[#allocation2] sm:$0xff] %v773
    %778 = vst [vmem:[#allocation2 + $0x8] sm:$0xff] %v774
    %779 = vst [vmem:[#allocation2 + $0x10] sm:$0xff] %v775
    %780 = vst [vmem:[#allocation2 + $0x18] sm:$0xff] %v776
    // Predicated region
    $region54: #{tpu_custom_call.1} parent=1 // pred_check
      _
    $region55: #{tpu_custom_call.1} parent=1 // pred_check_branch
      %782 = sbr.rel (0) target = $region57
    $region56: #{tpu_custom_call.1} parent=1 // pred_region
      %s784 = ssub.s32 512, 512
      %785 = vsyncadd [#allocation3], %s784
      %s786 = sshll.u32 [#allocation2], 4
      %s787 = int_to_ptr.vmem [resolvable:$true] %s786
      %792 = dma.vmem_to_hbm [thread:$0]  %s787, 512, %s13, [#allocation3], 128, 128, 8
    $region57: #{tpu_custom_call.1} parent=1 // pred_fallthru
      _
    // Predicated region
    $region58: #{tpu_custom_call.1} parent=1 // pred_check
      _
    $region59: #{tpu_custom_call.1} parent=1 // pred_check_branch
      %794 = sbr.rel (0) target = $region61
    $region60: #{tpu_custom_call.1} parent=1 // pred_region
      %795 = dma.done [#allocation3], 512
    $region61: #{tpu_custom_call.1} parent=1 // pred_fallthru
      _
    %796 = vsyncpa [#allocation3], 1

</llo_original>
